<compile_context>
chip_gen: v6e
topology: v6e:2x2x1
jax: 0.10.0
libtpu: 0.0.40
codegen_flags: <defaults>
</compile_context>

<pallas_src>
import jax
import jax.numpy as jnp
from jax.experimental import pallas as pl
from jax.experimental.pallas import tpu as pltpu


def _round_up(x, m):
    return ((x + m - 1) // m) * m


def _cdiv(a, b):
    return (a + b - 1) // b


def _block_vmem_bytes(shape, itemsize):
    """Approximate VMEM footprint of one block (lane pad 128, sublane pad 8)."""
    if len(shape) == 1:
        return _round_up(shape[0] * itemsize, 512)
    lead = 1
    for d in shape[:-2]:
        lead *= d
    return lead * _round_up(shape[-2], 8) * _round_up(shape[-1], 128) * itemsize


# -----------------------------------------------------------------------------
# Kernel
# -----------------------------------------------------------------------------
def critic_kernel(x_ref, w1_ref, w23_ref, b_ref, out_ref):
    """One batch tile of the fused twin-Q critic (feature-major layout).

    x_ref   : (in_dim, tile_b) bf16  -- [state; action]^T, batch in lanes
    w1_ref  : (Hp, in_dim)     bf16  -- [W1_q1 | W1_q2]^T, rows >= 2*h1 zero
    w23_ref : (2, Hp, Hp)      f32   -- [0]=blockdiag(W2)^T, [1]=heads^T (padded)
    b_ref   : (3, Hp, 1)       f32   -- b1 / b2 / b3 columns (zero padded)
    out_ref : (1, tile_b)      f32   -- min(Q1, Q2)^T  (lane-dense)
    """
    x = x_ref[...]

    # Layer 1, both Q nets at once:  h1^T = relu(W1^T x^T + b1)
    h = jnp.dot(w1_ref[...], x, preferred_element_type=jnp.float32) + b_ref[0]
    h = jnp.maximum(h, 0.0)

    # Layer 2 (block-diagonal keeps Q1 / Q2 independent).
    h = jnp.dot(w23_ref[0], h, preferred_element_type=jnp.float32) + b_ref[1]
    h = jnp.maximum(h, 0.0)

    # Heads: rows 0 / 1 of q are q1^T / q2^T (remaining padded rows are zero).
    q = jnp.dot(w23_ref[1], h, preferred_element_type=jnp.float32) + b_ref[2]

    # Elementwise min of two sublane rows (VPU) -> lane-dense (1, tile_b) store.
    out_ref[...] = jnp.minimum(q[0:1, :], q[1:2, :])


# -----------------------------------------------------------------------------
# Parameter construction / fusion (done once, not per forward call)
# -----------------------------------------------------------------------------
def make_critic_params(key, state_dim, neurons, action_dim, dtype=jnp.float32):
    """PyTorch-default-style uniform(+-1/sqrt(fan_in)) init.

    Returns [w1a,b1a,w2a,b2a,w3a,b3a, w1b,...] with weights in (in, out) layout.
    """
    dims = [state_dim + action_dim] + list(neurons) + [1]

    def one_net(key):
        params = []
        for d_in, d_out in zip(dims[:-1], dims[1:]):
            key, kw, kb = jax.random.split(key, 3)
            bound = 1.0 / (d_in ** 0.5)
            w = jax.random.uniform(kw, (d_in, d_out), dtype, -bound, bound)
            b = jax.random.uniform(kb, (1, d_out), dtype, -bound, bound)
            params += [w, b]
        return key, params

    key, q1 = one_net(key)
    key, q2 = one_net(key)
    return q1 + q2


def fuse_critic_params(params):
    """Fuse twin Q nets into 3 resident slabs for the transposed kernel."""
    (w1a, b1a, w2a, b2a, w3a, b3a,
     w1b, b1b, w2b, b2b, w3b, b3b) = params
    dt = w1a.dtype
    h1 = w1a.shape[1]
    h2 = w2a.shape[1]
    hp = _round_up(max(2 * h1, 2 * h2, 8), 8)     # common padded hidden width

    def pad_rc(m, rows, cols):
        return jnp.pad(m, ((0, rows - m.shape[0]), (0, cols - m.shape[1])))

    # Layer 1: [W1a | W1b]^T -> (hp, in_dim), streamed-operand dtype (bf16).
    w1t = pad_rc(jnp.concatenate([w1a, w1b], axis=1).T,
                 hp, w1a.shape[0]).astype(jnp.bfloat16)

    # Layer 2: blockdiag(W2a, W2b)^T -> (hp, hp), f32.
    z12 = jnp.zeros((h1, h2), dt)
    w2t = pad_rc(jnp.block([[w2a, z12], [z12, w2b]]).T, hp, hp)

    # Layer 3: blockdiag(w3a, w3b)^T -> (hp, hp), rows 0/1 are the two heads.
    z3 = jnp.zeros((h2, 1), dt)
    w3t = pad_rc(jnp.block([[w3a, z3], [z3, w3b]]).T, hp, hp)

    w23 = jnp.stack([w2t, w3t])                                   # (2, hp, hp)

    def pad_bias(b, n_valid):
        return jnp.pad(b.reshape(-1), (0, hp - n_valid))

    b1 = pad_bias(jnp.concatenate([b1a, b1b], axis=1), 2 * h1)
    b2 = pad_bias(jnp.concatenate([b2a, b2b], axis=1), 2 * h2)
    b3 = pad_bias(jnp.concatenate([b3a, b3b], axis=1), 2)
    bias = jnp.stack([b1, b2, b3]).reshape(3, hp, 1)              # (3, hp, 1)

    return w1t, w23, bias


# -----------------------------------------------------------------------------
# Forward wrapper
# -----------------------------------------------------------------------------
def critic_forward(x_t, fused_params, tile_b=4096):
    """x_t: (state_dim + action_dim, B) feature-major batch. Returns (B, 1)."""
    w1t, w23, bias = fused_params
    hp, in_dim = w1t.shape
    assert x_t.shape[0] == in_dim, "x_t must be (state_dim+action_dim, B)"
    B = x_t.shape[1]

    # ---- batch tiling: batch lives in the 128-lane dimension -----------------
    b_pad0 = _round_up(B, 128)                        # pad only to lane multiple
    tile_req = max(128, _round_up(min(int(tile_b), b_pad0), 128))
    n_tiles = _cdiv(b_pad0, tile_req)
    if n_tiles == 1 and b_pad0 >= 256:
        n_tiles = 2                                   # >=2 steps for v7x's 2 TCs
    tile = _round_up(_cdiv(b_pad0, n_tiles), 128)     # tile is a multiple of 128
    b_pad = n_tiles * tile                            # waste <= 128*n_tiles rows

    # Production callers should already hold x_t in bf16; cast+pad fuse into one
    # cheap XLA pass here for the demo.
    x_t = x_t.astype(jnp.bfloat16)
    if b_pad != B:
        x_t = jnp.pad(x_t, ((0, 0), (0, b_pad - B)))

    # ---- explicit VMEM budget (streamed blocks are double-buffered) ----------
    resident = (_block_vmem_bytes((hp, in_dim), 2)
                + _block_vmem_bytes((2, hp, hp), 4)
                + _block_vmem_bytes((3, hp, 1), 4))
    streamed = (_block_vmem_bytes((in_dim, tile), 2)
                + _block_vmem_bytes((1, tile), 4))
    interm = 3 * hp * tile * 4                        # h1/h2/q live values
    vmem_limit = int(min(max(2 * (resident + streamed) + interm + (4 << 20),
                             16 << 20), 48 << 20))

    flops = 2 * b_pad * hp * (in_dim + 2 * hp)
    bytes_accessed = (b_pad * in_dim * 2 + b_pad * 4
                      + int(w1t.size) * 2 + int(w23.size) * 4 + int(bias.size) * 4)

    out = pl.pallas_call(
        critic_kernel,
        out_shape=jax.ShapeDtypeStruct((1, b_pad), jnp.float32),
        grid=(n_tiles,),
        in_specs=[
            pl.BlockSpec((in_dim, tile), lambda i: (0, i)),       # streamed x^T
            pl.BlockSpec((hp, in_dim), lambda i: (0, 0)),         # resident W1^T
            pl.BlockSpec((2, hp, hp), lambda i: (0, 0, 0)),       # resident W2/W3
            pl.BlockSpec((3, hp, 1), lambda i: (0, 0, 0)),        # resident biases
        ],
        out_specs=pl.BlockSpec((1, tile), lambda i: (0, i)),
        compiler_params=pltpu.CompilerParams(
            dimension_semantics=("parallel",),
            vmem_limit_bytes=vmem_limit),
        cost_estimate=pl.CostEstimate(
            flops=int(flops), transcendentals=0,
            bytes_accessed=int(bytes_accessed)),
    )(x_t, w1t, w23, bias)

    # Lane-dense (1, b_pad) -> (B, 1) to match the PyTorch module's output.
    # Padded batch columns carry bias-only garbage and are dropped here.
    return out[:, :B].T


# -----------------------------------------------------------------------------
# Pure-JAX reference (un-fused), mirrors the PyTorch module
# -----------------------------------------------------------------------------
def critic_reference(state, action, params):
    (w1a, b1a, w2a, b2a, w3a, b3a,
     w1b, b1b, w2b, b2b, w3b, b3b) = params
    x = jnp.concatenate([state, action], axis=1)
    hi = jax.lax.Precision.HIGHEST

    def q(w1, b1, w2, b2, w3, b3):
        h = jnp.maximum(jnp.dot(x, w1, precision=hi) + b1, 0.0)
        h = jnp.maximum(jnp.dot(h, w2, precision=hi) + b2, 0.0)
        return jnp.dot(h, w3, precision=hi) + b3

    return jnp.minimum(q(w1a, b1a, w2a, b2a, w3a, b3a),
                       q(w1b, b1b, w2b, b2b, w3b, b3b))


if __name__ == "__main__":
    # Small shapes consistent with the module.
    batch, state_dim, action_dim = 8, 24, 8
    neurons = (32, 32)

    key = jax.random.PRNGKey(0)
    k_params, k_state, k_action = jax.random.split(key, 3)

    params = make_critic_params(k_params, state_dim, neurons, action_dim)
    fused = fuse_critic_params(params)          # fusion done once, off hot path

    state = jax.random.normal(k_state, (batch, state_dim), jnp.float32)
    action = jax.random.normal(k_action, (batch, action_dim), jnp.float32)

    # Production layout: replay buffer stores the concatenated, feature-major
    # batch; built once here for the demo.
    x_t = jnp.concatenate([state, action], axis=1).T

    out = critic_forward(x_t, fused)
    out = jax.block_until_ready(out)
    assert out.shape == (batch, 1)

    # Tight check: reference fed the same bf16-rounded streamed operands.
    def _rt(a):
        return a.astype(jnp.bfloat16).astype(jnp.float32)

    params_rt = list(params)
    params_rt[0] = _rt(params_rt[0])   # w1a
    params_rt[6] = _rt(params_rt[6])   # w1b
    ref_tight = critic_reference(_rt(state), _rt(action), params_rt)
    assert jnp.allclose(out, ref_tight, atol=2e-4, rtol=1e-3), \
        float(jnp.max(jnp.abs(out - ref_tight)))

    # Loose check against the exact f32 PyTorch-equivalent math
    # (difference is only bf16 rounding of the streamed input / W1).
    ref = critic_reference(state, action, params)
    assert jnp.allclose(out, ref, atol=5e-2, rtol=5e-2), \
        float(jnp.max(jnp.abs(out - ref)))

    print("KERNEL_OK")
</pallas_src>

<mosaic_0001>
module attributes {stable_mosaic.version = 11 : i64} {
  func.func @critic_kernel(%arg0: i32, %arg1: memref<32x128xbf16, #tpu.memory_space<vmem>>, %arg2: memref<64x32xbf16, #tpu.memory_space<vmem>>, %arg3: memref<2x64x64xf32, #tpu.memory_space<vmem>>, %arg4: memref<3x64x1xf32, #tpu.memory_space<vmem>>, %arg5: memref<1x128xf32, #tpu.memory_space<vmem>>) attributes {dimension_semantics = [#tpu.dimension_semantics<parallel>], iteration_bounds = array<i64: 1>, scalar_prefetch = 0 : i64, scratch_operands = 0 : i64, tpu.core_type = #tpu.core_type<tc>, window_params = [{transform_indices = @transform_0, window_bounds = array<i64: 32, 128>}, {pipeline_mode = #tpu.pipeline_mode<synchronous>, transform_indices = @transform_1, window_bounds = array<i64: 64, 32>}, {pipeline_mode = #tpu.pipeline_mode<synchronous>, transform_indices = @transform_2, window_bounds = array<i64: 2, 64, 64>}, {pipeline_mode = #tpu.pipeline_mode<synchronous>, transform_indices = @transform_3, window_bounds = array<i64: 3, 64, 1>}, {transform_indices = @transform_4, window_bounds = array<i64: 1, 128>}]} {
    %c0 = arith.constant 0 : index
    %c0_0 = arith.constant 0 : index
    %0 = vector.load %arg1[%c0, %c0_0] : memref<32x128xbf16, #tpu.memory_space<vmem>>, vector<32x128xbf16>
    %c0_1 = arith.constant 0 : index
    %c0_2 = arith.constant 0 : index
    %1 = vector.load %arg2[%c0_1, %c0_2] : memref<64x32xbf16, #tpu.memory_space<vmem>>, vector<64x32xbf16>
    %cst = arith.constant dense<0.000000e+00> : vector<64x128xf32>
    %2 = tpu.matmul %1, %0, %cst {dimension_numbers = #tpu.dot_dimension_numbers<[1], [0], [0], [1], [0, 0, 1, 1], [], []>} : vector<64x32xbf16>, vector<32x128xbf16>, vector<64x128xf32> -> vector<64x128xf32>
    %c0_3 = arith.constant 0 : index
    %c0_4 = arith.constant 0 : index
    %c0_5 = arith.constant 0 : index
    %3 = vector.load %arg4[%c0_3, %c0_4, %c0_5] : memref<3x64x1xf32, #tpu.memory_space<vmem>>, vector<1x64x1xf32>
    %4 = vector.shape_cast %3 : vector<1x64x1xf32> to vector<64x1xf32>
    %5 = vector.broadcast %4 : vector<64x1xf32> to vector<64x128xf32>
    %6 = arith.addf %2, %5 : vector<64x128xf32>
    %cst_6 = arith.constant 0.000000e+00 : f32
    %7 = vector.broadcast %cst_6 : f32 to vector<64x128xf32>
    %8 = arith.maximumf %6, %7 : vector<64x128xf32>
    %c0_7 = arith.constant 0 : index
    %c0_8 = arith.constant 0 : index
    %c0_9 = arith.constant 0 : index
    %9 = vector.load %arg3[%c0_7, %c0_8, %c0_9] : memref<2x64x64xf32, #tpu.memory_space<vmem>>, vector<1x64x64xf32>
    %10 = vector.shape_cast %9 : vector<1x64x64xf32> to vector<64x64xf32>
    %cst_10 = arith.constant dense<0.000000e+00> : vector<64x128xf32>
    %11 = tpu.matmul %10, %8, %cst_10 {dimension_numbers = #tpu.dot_dimension_numbers<[1], [0], [0], [1], [0, 0, 1, 1], [], []>} : vector<64x64xf32>, vector<64x128xf32>, vector<64x128xf32> -> vector<64x128xf32>
    %c1 = arith.constant 1 : index
    %c0_11 = arith.constant 0 : index
    %c0_12 = arith.constant 0 : index
    %12 = vector.load %arg4[%c1, %c0_11, %c0_12] : memref<3x64x1xf32, #tpu.memory_space<vmem>>, vector<1x64x1xf32>
    %13 = vector.shape_cast %12 : vector<1x64x1xf32> to vector<64x1xf32>
    %14 = vector.broadcast %13 : vector<64x1xf32> to vector<64x128xf32>
    %15 = arith.addf %11, %14 : vector<64x128xf32>
    %cst_13 = arith.constant 0.000000e+00 : f32
    %16 = vector.broadcast %cst_13 : f32 to vector<64x128xf32>
    %17 = arith.maximumf %15, %16 : vector<64x128xf32>
    %c1_14 = arith.constant 1 : index
    %c0_15 = arith.constant 0 : index
    %c0_16 = arith.constant 0 : index
    %18 = vector.load %arg3[%c1_14, %c0_15, %c0_16] : memref<2x64x64xf32, #tpu.memory_space<vmem>>, vector<1x64x64xf32>
    %19 = vector.shape_cast %18 : vector<1x64x64xf32> to vector<64x64xf32>
    %cst_17 = arith.constant dense<0.000000e+00> : vector<64x128xf32>
    %20 = tpu.matmul %19, %17, %cst_17 {dimension_numbers = #tpu.dot_dimension_numbers<[1], [0], [0], [1], [0, 0, 1, 1], [], []>} : vector<64x64xf32>, vector<64x128xf32>, vector<64x128xf32> -> vector<64x128xf32>
    %c2 = arith.constant 2 : index
    %c0_18 = arith.constant 0 : index
    %c0_19 = arith.constant 0 : index
    %21 = vector.load %arg4[%c2, %c0_18, %c0_19] : memref<3x64x1xf32, #tpu.memory_space<vmem>>, vector<1x64x1xf32>
    %22 = vector.shape_cast %21 : vector<1x64x1xf32> to vector<64x1xf32>
    %23 = vector.broadcast %22 : vector<64x1xf32> to vector<64x128xf32>
    %24 = arith.addf %20, %23 : vector<64x128xf32>
    %25 = vector.extract_strided_slice %24 {offsets = [0, 0], sizes = [1, 128], strides = [1, 1]} : vector<64x128xf32> to vector<1x128xf32>
    %26 = vector.extract_strided_slice %24 {offsets = [1, 0], sizes = [1, 128], strides = [1, 1]} : vector<64x128xf32> to vector<1x128xf32>
    %27 = arith.minimumf %25, %26 : vector<1x128xf32>
    %c0_20 = arith.constant 0 : index
    %c0_21 = arith.constant 0 : index
    %28 = vector.load %arg5[%c0_20, %c0_21] : memref<1x128xf32, #tpu.memory_space<vmem>>, vector<1x128xf32>
    tpu.vector_store %arg5[%c0_20, %c0_21], %27 {strides = array<i32>} : memref<1x128xf32, #tpu.memory_space<vmem>>, vector<1x128xf32>,
    return
  }
  func.func @transform_0(%arg0: i32) -> (i32, i32) {
    %c0_i32 = arith.constant 0 : i32
    %c0_i32_0 = arith.constant 0 : i32
    return %c0_i32, %arg0 : i32, i32
  }
  func.func @transform_1(%arg0: i32) -> (i32, i32) {
    %c0_i32 = arith.constant 0 : i32
    %c0_i32_0 = arith.constant 0 : i32
    %c0_i32_1 = arith.constant 0 : i32
    return %c0_i32, %c0_i32_0 : i32, i32
  }
  func.func @transform_2(%arg0: i32) -> (i32, i32, i32) {
    %c0_i32 = arith.constant 0 : i32
    %c0_i32_0 = arith.constant 0 : i32
    %c0_i32_1 = arith.constant 0 : i32
    %c0_i32_2 = arith.constant 0 : i32
    return %c0_i32, %c0_i32_0, %c0_i32_1 : i32, i32, i32
  }
  func.func @transform_3(%arg0: i32) -> (i32, i32, i32) {
    %c0_i32 = arith.constant 0 : i32
    %c0_i32_0 = arith.constant 0 : i32
    %c0_i32_1 = arith.constant 0 : i32
    %c0_i32_2 = arith.constant 0 : i32
    return %c0_i32, %c0_i32_0, %c0_i32_1 : i32, i32, i32
  }
  func.func @transform_4(%arg0: i32) -> (i32, i32) {
    %c0_i32 = arith.constant 0 : i32
    %c0_i32_0 = arith.constant 0 : i32
    return %c0_i32, %arg0 : i32, i32
  }
}

</mosaic_0001>

<llo_original>
// kernel: tpu_custom_call.1
$region0: #{tpu_custom_call.1}
  #allocation0 [shape = 'u32[]', space=smem, size = 0x4, offset = 0x4, fixed_abs, tag = 'smem constant byte address 0x4 - core index']
  #allocation1 [shape = 'u32[144,128]{1,0:T(1,128)}', space=vmem, size = 0x12000, scoped, tag = 'internal scratch']
  %s0 = inlined_call_operand.vmem [shape: bf16[32,128], index: 0, kind: input, shape index: {}]
  %s1 = inlined_call_operand.vmem [shape: bf16[64,32], index: 1, kind: input, shape index: {}]
  %s2 = inlined_call_operand.vmem [shape: f32[2,64,64], index: 2, kind: input, shape index: {}]
  %s3 = inlined_call_operand.vmem [shape: f32[3,64,1], index: 3, kind: input, shape index: {}]
  %s4 = inlined_call_operand.hbm [shape: f32[1,128], index: 4, kind: output, shape index: {}]
  %s5 = sld [smem:[#allocation0]]
  $region26: #{tpu_custom_call.1} parent=0
    _
  %s7 = ssub.s32 1, %s5
  %s8 = scalar_select 0, %s7, %s5
  $region1: #{tpu_custom_call.1} parent=0
    #allocation2 [shape = 'u8[512]{0}', space=vmem, size = 0x400, scoped, tag = 'output window, operand 0, single buffered']
    #allocation3 [shape = 's32[1]{0}', space=sflag, size = 0x4, scoped, tag = 'scoped memory for tpu_custom_call.1']
    %9 = vsyncpa [#allocation3], 0
    // Predicated region
    $region2: #{tpu_custom_call.1} parent=1 // pred_check
      _
    $region3: #{tpu_custom_call.1} parent=1 // pred_check_branch
      %11 = sbr.rel (0) target = $region5
    $region4: #{tpu_custom_call.1} parent=1 // pred_region
      _
    $region5: #{tpu_custom_call.1} parent=1 // pred_fallthru
      _
    // Predicated region
    $region6: #{tpu_custom_call.1} parent=1 // pred_check
      _
    $region7: #{tpu_custom_call.1} parent=1 // pred_check_branch
      %13 = sbr.rel (0) target = $region9
    $region8: #{tpu_custom_call.1} parent=1 // pred_region
      _
    $region9: #{tpu_custom_call.1} parent=1 // pred_fallthru
      _
    // Predicated region
    $region10: #{tpu_custom_call.1} parent=1 // pred_check
      _
    $region11: #{tpu_custom_call.1} parent=1 // pred_check_branch
      %15 = sbr.rel (0) target = $region13
    $region12: #{tpu_custom_call.1} parent=1 // pred_region
      _
    $region13: #{tpu_custom_call.1} parent=1 // pred_fallthru
      _
    // Predicated region
    $region14: #{tpu_custom_call.1} parent=1 // pred_check
      _
    $region15: #{tpu_custom_call.1} parent=1 // pred_check_branch
      %17 = sbr.rel (0) target = $region17
    $region16: #{tpu_custom_call.1} parent=1 // pred_region
      _
    $region17: #{tpu_custom_call.1} parent=1 // pred_fallthru
      _
    %v19 = vld [vmem:[%s0] sm:$0xf]
    %v20 = vld [vmem:[%s0 + $0x4] sm:$0xf]
    %v21 = vld [vmem:[%s0 + $0x8] sm:$0xf]
    %v22 = vld [vmem:[%s0 + $0xc] sm:$0xf]
    %v23 = vld [vmem:[%s1] sm:$0xf]
    %v24 = vld [vmem:[%s1 + $0x4] sm:$0xf]
    %v25 = vld [vmem:[%s1 + $0x8] sm:$0xf]
    %v26 = vld [vmem:[%s1 + $0xc] sm:$0xf]
    %v27 = vld [vmem:[%s1 + $0x10] sm:$0xf]
    %v28 = vld [vmem:[%s1 + $0x14] sm:$0xf]
    %v29 = vld [vmem:[%s1 + $0x18] sm:$0xf]
    %v30 = vld [vmem:[%s1 + $0x1c] sm:$0xf]
    %v31 = vld [vmem:[%s3] sm:$0xff]
    %v32 = vld [vmem:[%s3 + $0x8] sm:$0xff]
    %v33 = vld [vmem:[%s3 + $0x10] sm:$0xff]
    %v34 = vld [vmem:[%s3 + $0x18] sm:$0xff]
    %v35 = vld [vmem:[%s3 + $0x20] sm:$0xff]
    %v36 = vld [vmem:[%s3 + $0x28] sm:$0xff]
    %v37 = vld [vmem:[%s3 + $0x30] sm:$0xff]
    %v38 = vld [vmem:[%s3 + $0x38] sm:$0xff]
    %40 = vset.pattern.permute.xlu0 0
    %41 = vperm.xlu0 %40, %v31
    %v42 = vpop.permute.xlu0 %41
    %45 = vset.pattern.permute.xlu0 0
    %46 = vperm.xlu0 %45, %v32
    %v47 = vpop.permute.xlu0 %46
    %50 = vset.pattern.permute.xlu0 0
    %51 = vperm.xlu0 %50, %v33
    %v52 = vpop.permute.xlu0 %51
    %55 = vset.pattern.permute.xlu0 0
    %56 = vperm.xlu0 %55, %v34
    %v57 = vpop.permute.xlu0 %56
    %60 = vset.pattern.permute.xlu0 0
    %61 = vperm.xlu0 %60, %v35
    %v62 = vpop.permute.xlu0 %61
    %65 = vset.pattern.permute.xlu0 0
    %66 = vperm.xlu0 %65, %v36
    %v67 = vpop.permute.xlu0 %66
    %70 = vset.pattern.permute.xlu0 0
    %71 = vperm.xlu0 %70, %v37
    %v72 = vpop.permute.xlu0 %71
    %75 = vset.pattern.permute.xlu0 0
    %76 = vperm.xlu0 %75, %v38
    %v77 = vpop.permute.xlu0 %76
    %v87 = vunpack.c.l.b16 %v23
    %v88 = vunpack.c.l.b16 %v24
    %v89 = vunpack.c.l.b16 %v25
    %v90 = vunpack.c.l.b16 %v26
    %v91 = vunpack.c.l.b16 %v27
    %v92 = vunpack.c.l.b16 %v28
    %v93 = vunpack.c.l.b16 %v29
    %v94 = vunpack.c.l.b16 %v30
    %v95 = vpack.c.b16 %v88, %v87
    %v96 = vpack.c.b16 %v90, %v89
    %v97 = vpack.c.b16 %v92, %v91
    %v98 = vpack.c.b16 %v94, %v93
    %v103 = vunpack.c.l.b16 %v19
    %v104 = vunpack.c.l.b16 %v20
    %v105 = vunpack.c.l.b16 %v21
    %v106 = vunpack.c.l.b16 %v22
    %v107 = vpack.c.b16 %v104, %v103
    %v108 = vpack.c.b16 %v106, %v105
    %vm111 = vcmask 261120
    %v113 = vsel %vm111, %v95, 0
    %v116 = vsel %vm111, %v96, 0
    %v119 = vsel %vm111, %v97, 0
    %v122 = vsel %vm111, %v98, 0
    %124 = vmatprep.subr.bf16.mxu0 0
    %125 = vmatpush1.bf16.msra.mxu0 0
    %126 = vmatprep.subr.bf16.mxu0 0
    %127 = vmatpush1.bf16.msra.mxu0 0
    %128 = vmatprep.subr.bf16.mxu0 0
    %129 = vmatpush1.bf16.msra.mxu0 0
    %130 = vmatprep.subr.bf16.mxu0 0
    %131 = vmatpush1.bf16.msra.mxu0 0
    %132 = vmatprep.subr.bf16.mxu0 0
    %133 = vmatpush1.bf16.msra.mxu0 0
    %134 = vmatprep.subr.bf16.mxu0 0
    %135 = vmatpush1.bf16.msra.mxu0 0
    %136 = vmatprep.subr.bf16.mxu0 0
    %137 = vmatpush1.bf16.msra.mxu0 %v108
    %138 = vmatprep.subr.bf16.mxu0 0
    %139 = vmatpush1.bf16.msra.mxu0 %v107
    %140 = vmatprep.subr.bf16.mxu0 0
    %141 = vmatpush2.bf16.msra.mxu0 0
    %142 = vmatprep.subr.bf16.mxu0 0
    %143 = vmatpush2.bf16.msra.mxu0 0
    %144 = vmatprep.subr.bf16.mxu0 0
    %145 = vmatpush2.bf16.msra.mxu0 0
    %146 = vmatprep.subr.bf16.mxu0 0
    %147 = vmatpush2.bf16.msra.mxu0 0
    %148 = vmatprep.subr.bf16.mxu0 0
    %149 = vmatpush2.bf16.msra.mxu0 0
    %150 = vmatprep.subr.bf16.mxu0 0
    %151 = vmatpush2.bf16.msra.mxu0 0
    %152 = vmatprep.subr.bf16.mxu0 0
    %153 = vmatpush2.bf16.msra.mxu0 0
    %154 = vmatprep.subr.bf16.mxu0 0
    %155 = vmatpush2.bf16.msra.mxu0 0
    %156 = vmatprep.mubr.bf16.mxu0 0
    %157 = vmatmul.mubr.bf16.gmra.mxu0 %v113
    %v158 = vpop.f32.mrf.mxu0
    %v159 = vadd.f32 %v42, %v158
    %v160 = vpop.f32.mrf.mxu0
    %v161 = vpop.f32.mrf.mxu0
    %v162 = vadd.f32 %v47, %v161
    %v163 = vpop.f32.mrf.mxu0
    %164 = vmatprep.mubr.bf16.mxu0 0
    %165 = vmatmul.mubr.bf16.gmra.mxu0 %v116
    %v166 = vpop.f32.mrf.mxu0
    %v167 = vadd.f32 %v52, %v166
    %v168 = vpop.f32.mrf.mxu0
    %v169 = vpop.f32.mrf.mxu0
    %v170 = vadd.f32 %v57, %v169
    %v171 = vpop.f32.mrf.mxu0
    %172 = vmatprep.mubr.bf16.mxu0 0
    %173 = vmatmul.mubr.bf16.gmra.mxu0 %v119
    %v174 = vpop.f32.mrf.mxu0
    %v175 = vadd.f32 %v62, %v174
    %v176 = vpop.f32.mrf.mxu0
    %v177 = vpop.f32.mrf.mxu0
    %v178 = vadd.f32 %v67, %v177
    %v179 = vpop.f32.mrf.mxu0
    %180 = vmatprep.mubr.bf16.mxu0 0
    %181 = vmatmul.mubr.bf16.gmra.mxu0 %v122
    %v182 = vpop.f32.mrf.mxu0
    %v183 = vadd.f32 %v72, %v182
    %v184 = vpop.f32.mrf.mxu0
    %v185 = vpop.f32.mrf.mxu0
    %v186 = vadd.f32 %v77, %v185
    %v187 = vpop.f32.mrf.mxu0
    %188 = vdwg.mxu0
    %v189 = vmax.f32 %v159, 0.0
    %v190 = vmax.f32 %v162, 0.0
    %v191 = vmax.f32 %v167, 0.0
    %v192 = vmax.f32 %v170, 0.0
    %v193 = vmax.f32 %v175, 0.0
    %v194 = vmax.f32 %v178, 0.0
    %v195 = vmax.f32 %v183, 0.0
    %v196 = vmax.f32 %v186, 0.0
    %v197 = vld [vmem:[%s2] sm:$0xff]
    %v198 = vld [vmem:[%s2 + $0x8] sm:$0xff]
    %v199 = vld [vmem:[%s2 + $0x10] sm:$0xff]
    %v200 = vld [vmem:[%s2 + $0x18] sm:$0xff]
    %v201 = vld [vmem:[%s2 + $0x20] sm:$0xff]
    %v202 = vld [vmem:[%s2 + $0x28] sm:$0xff]
    %v203 = vld [vmem:[%s2 + $0x30] sm:$0xff]
    %v204 = vld [vmem:[%s2 + $0x38] sm:$0xff]
    %s205 = scalar_lea.vmem %s3, 64
    %v206 = vld [vmem:[%s205] sm:$0xff]
    %v207 = vld [vmem:[%s205 + $0x8] sm:$0xff]
    %v208 = vld [vmem:[%s205 + $0x10] sm:$0xff]
    %v209 = vld [vmem:[%s205 + $0x18] sm:$0xff]
    %v210 = vld [vmem:[%s205 + $0x20] sm:$0xff]
    %v211 = vld [vmem:[%s205 + $0x28] sm:$0xff]
    %v212 = vld [vmem:[%s205 + $0x30] sm:$0xff]
    %v213 = vld [vmem:[%s205 + $0x38] sm:$0xff]
    %215 = vset.pattern.permute.xlu0 0
    %216 = vperm.xlu0 %215, %v206
    %v217 = vpop.permute.xlu0 %216
    %220 = vset.pattern.permute.xlu0 0
    %221 = vperm.xlu0 %220, %v207
    %v222 = vpop.permute.xlu0 %221
    %225 = vset.pattern.permute.xlu0 0
    %226 = vperm.xlu0 %225, %v208
    %v227 = vpop.permute.xlu0 %226
    %230 = vset.pattern.permute.xlu0 0
    %231 = vperm.xlu0 %230, %v209
    %v232 = vpop.permute.xlu0 %231
    %235 = vset.pattern.permute.xlu0 0
    %236 = vperm.xlu0 %235, %v210
    %v237 = vpop.permute.xlu0 %236
    %240 = vset.pattern.permute.xlu0 0
    %241 = vperm.xlu0 %240, %v211
    %v242 = vpop.permute.xlu0 %241
    %245 = vset.pattern.permute.xlu0 0
    %246 = vperm.xlu0 %245, %v212
    %v247 = vpop.permute.xlu0 %246
    %250 = vset.pattern.permute.xlu0 0
    %251 = vperm.xlu0 %250, %v213
    %v252 = vpop.permute.xlu0 %251
    %vm254 = vcmask 523264
    %v256 = vsel %vm254, %v197, 0
    %v259 = vsel %vm254, %v198, 0
    %v262 = vsel %vm254, %v199, 0
    %v265 = vsel %vm254, %v200, 0
    %v268 = vsel %vm254, %v201, 0
    %v271 = vsel %vm254, %v202, 0
    %v274 = vsel %vm254, %v203, 0
    %v277 = vsel %vm254, %v204, 0
    %279 = vmatprep.subr.mxu0 0.0
    %280 = vmatpush1.msra.mxu0 0.0
    %281 = vmatprep.subr.mxu0 0.0
    %282 = vmatpush1.msra.mxu0 0.0
    %283 = vmatprep.subr.mxu0 0.0
    %284 = vmatpush1.msra.mxu0 0.0
    %285 = vmatprep.subr.mxu0 0.0
    %286 = vmatpush1.msra.mxu0 0.0
    %287 = vmatprep.subr.mxu0 0.0
    %288 = vmatpush1.msra.mxu0 0.0
    %289 = vmatprep.subr.mxu0 0.0
    %290 = vmatpush1.msra.mxu0 0.0
    %291 = vmatprep.subr.mxu0 0.0
    %292 = vmatpush1.msra.mxu0 0.0
    %293 = vmatprep.subr.mxu0 0.0
    %294 = vmatpush1.msra.mxu0 0.0
    %295 = vmatprep.subr.mxu0 0.0
    %296 = vmatpush1.msra.mxu0 %v196
    %297 = vmatprep.subr.mxu0 0.0
    %298 = vmatpush1.msra.mxu0 %v195
    %299 = vmatprep.subr.mxu0 0.0
    %300 = vmatpush1.msra.mxu0 %v194
    %301 = vmatprep.subr.mxu0 0.0
    %302 = vmatpush1.msra.mxu0 %v193
    %303 = vmatprep.subr.mxu0 0.0
    %304 = vmatpush1.msra.mxu0 %v192
    %305 = vmatprep.subr.mxu0 0.0
    %306 = vmatpush1.msra.mxu0 %v191
    %307 = vmatprep.subr.mxu0 0.0
    %308 = vmatpush1.msra.mxu0 %v190
    %309 = vmatprep.subr.mxu0 0.0
    %310 = vmatpush1.msra.mxu0 %v189
    %311 = vmatprep.subr.mxu0 0.0
    %312 = vmatpush2.msra.mxu0 0.0
    %313 = vmatprep.subr.mxu0 0.0
    %314 = vmatpush2.msra.mxu0 0.0
    %315 = vmatprep.subr.mxu0 0.0
    %316 = vmatpush2.msra.mxu0 0.0
    %317 = vmatprep.subr.mxu0 0.0
    %318 = vmatpush2.msra.mxu0 0.0
    %319 = vmatprep.subr.mxu0 0.0
    %320 = vmatpush2.msra.mxu0 0.0
    %321 = vmatprep.subr.mxu0 0.0
    %322 = vmatpush2.msra.mxu0 0.0
    %323 = vmatprep.subr.mxu0 0.0
    %324 = vmatpush2.msra.mxu0 0.0
    %325 = vmatprep.subr.mxu0 0.0
    %326 = vmatpush2.msra.mxu0 0.0
    %327 = vmatprep.subr.mxu0 0.0
    %328 = vmatpush2.msra.mxu0 0.0
    %329 = vmatprep.subr.mxu0 0.0
    %330 = vmatpush2.msra.mxu0 0.0
    %331 = vmatprep.subr.mxu0 0.0
    %332 = vmatpush2.msra.mxu0 0.0
    %333 = vmatprep.subr.mxu0 0.0
    %334 = vmatpush2.msra.mxu0 0.0
    %335 = vmatprep.subr.mxu0 0.0
    %336 = vmatpush2.msra.mxu0 0.0
    %337 = vmatprep.subr.mxu0 0.0
    %338 = vmatpush2.msra.mxu0 0.0
    %339 = vmatprep.subr.mxu0 0.0
    %340 = vmatpush2.msra.mxu0 0.0
    %341 = vmatprep.subr.mxu0 0.0
    %342 = vmatpush2.msra.mxu0 0.0
    %343 = vmatprep.mubr.f32.mxu0 0.0
    %344 = vmatmul.mubr.f32.gmra.mxu0 %v256
    %v345 = vpop.f32.mrf.mxu0
    %v346 = vadd.f32 %v217, %v345
    %v347 = vpop.f32.mrf.mxu0
    %348 = vmatprep.mubr.f32.mxu0 0.0
    %349 = vmatmul.mubr.f32.gmra.mxu0 %v259
    %v350 = vpop.f32.mrf.mxu0
    %v351 = vadd.f32 %v222, %v350
    %v352 = vpop.f32.mrf.mxu0
    %353 = vmatprep.mubr.f32.mxu0 0.0
    %354 = vmatmul.mubr.f32.gmra.mxu0 %v262
    %v355 = vpop.f32.mrf.mxu0
    %v356 = vadd.f32 %v227, %v355
    %v357 = vpop.f32.mrf.mxu0
    %358 = vmatprep.mubr.f32.mxu0 0.0
    %359 = vmatmul.mubr.f32.gmra.mxu0 %v265
    %v360 = vpop.f32.mrf.mxu0
    %v361 = vadd.f32 %v232, %v360
    %v362 = vpop.f32.mrf.mxu0
    %363 = vmatprep.mubr.f32.mxu0 0.0
    %364 = vmatmul.mubr.f32.gmra.mxu0 %v268
    %v365 = vpop.f32.mrf.mxu0
    %v366 = vadd.f32 %v237, %v365
    %v367 = vpop.f32.mrf.mxu0
    %368 = vmatprep.mubr.f32.mxu0 0.0
    %369 = vmatmul.mubr.f32.gmra.mxu0 %v271
    %v370 = vpop.f32.mrf.mxu0
    %v371 = vadd.f32 %v242, %v370
    %v372 = vpop.f32.mrf.mxu0
    %373 = vmatprep.mubr.f32.mxu0 0.0
    %374 = vmatmul.mubr.f32.gmra.mxu0 %v274
    %v375 = vpop.f32.mrf.mxu0
    %v376 = vadd.f32 %v247, %v375
    %v377 = vpop.f32.mrf.mxu0
    %378 = vmatprep.mubr.f32.mxu0 0.0
    %379 = vmatmul.mubr.f32.gmra.mxu0 %v277
    %v380 = vpop.f32.mrf.mxu0
    %v381 = vadd.f32 %v252, %v380
    %v382 = vpop.f32.mrf.mxu0
    %383 = vdwg.mxu0
    %v384 = vmax.f32 %v346, 0.0
    %v385 = vmax.f32 %v351, 0.0
    %v386 = vmax.f32 %v356, 0.0
    %v387 = vmax.f32 %v361, 0.0
    %v388 = vmax.f32 %v366, 0.0
    %v389 = vmax.f32 %v371, 0.0
    %v390 = vmax.f32 %v376, 0.0
    %v391 = vmax.f32 %v381, 0.0
    %s392 = scalar_lea.vmem %s2, 64
    %v393 = vld [vmem:[%s392] sm:$0xff]
    %v394 = vld [vmem:[%s392 + $0x8] sm:$0xff]
    %v395 = vld [vmem:[%s392 + $0x10] sm:$0xff]
    %v396 = vld [vmem:[%s392 + $0x18] sm:$0xff]
    %v397 = vld [vmem:[%s392 + $0x20] sm:$0xff]
    %v398 = vld [vmem:[%s392 + $0x28] sm:$0xff]
    %v399 = vld [vmem:[%s392 + $0x30] sm:$0xff]
    %v400 = vld [vmem:[%s392 + $0x38] sm:$0xff]
    %s401 = scalar_lea.vmem %s3, 128
    %v402 = vld [vmem:[%s401] sm:$0xff]
    %v403 = vld [vmem:[%s401 + $0x8] sm:$0xff]
    %v404 = vld [vmem:[%s401 + $0x10] sm:$0xff]
    %v405 = vld [vmem:[%s401 + $0x18] sm:$0xff]
    %v406 = vld [vmem:[%s401 + $0x20] sm:$0xff]
    %v407 = vld [vmem:[%s401 + $0x28] sm:$0xff]
    %v408 = vld [vmem:[%s401 + $0x30] sm:$0xff]
    %v409 = vld [vmem:[%s401 + $0x38] sm:$0xff]
    %411 = vset.pattern.permute.xlu0 0
    %412 = vperm.xlu0 %411, %v402
    %v413 = vpop.permute.xlu0 %412
    %416 = vset.pattern.permute.xlu0 0
    %417 = vperm.xlu0 %416, %v403
    %v418 = vpop.permute.xlu0 %417
    %420 = vset.pattern.permute.xlu0 0
    %421 = vperm.xlu0 %420, %v404
    %v422 = vpop.permute.xlu0 %421
    %424 = vset.pattern.permute.xlu0 0
    %425 = vperm.xlu0 %424, %v405
    %v426 = vpop.permute.xlu0 %425
    %428 = vset.pattern.permute.xlu0 0
    %429 = vperm.xlu0 %428, %v406
    %v430 = vpop.permute.xlu0 %429
    %432 = vset.pattern.permute.xlu0 0
    %433 = vperm.xlu0 %432, %v407
    %v434 = vpop.permute.xlu0 %433
    %436 = vset.pattern.permute.xlu0 0
    %437 = vperm.xlu0 %436, %v408
    %v438 = vpop.permute.xlu0 %437
    %440 = vset.pattern.permute.xlu0 0
    %441 = vperm.xlu0 %440, %v409
    %v442 = vpop.permute.xlu0 %441
    %v444 = vsel %vm254, %v393, 0
    %v447 = vsel %vm254, %v394, 0
    %v450 = vsel %vm254, %v395, 0
    %v453 = vsel %vm254, %v396, 0
    %v456 = vsel %vm254, %v397, 0
    %v459 = vsel %vm254, %v398, 0
    %v462 = vsel %vm254, %v399, 0
    %v465 = vsel %vm254, %v400, 0
    %467 = vmatprep.subr.mxu0 0.0
    %468 = vmatpush1.msra.mxu0 0.0
    %469 = vmatprep.subr.mxu0 0.0
    %470 = vmatpush1.msra.mxu0 0.0
    %471 = vmatprep.subr.mxu0 0.0
    %472 = vmatpush1.msra.mxu0 0.0
    %473 = vmatprep.subr.mxu0 0.0
    %474 = vmatpush1.msra.mxu0 0.0
    %475 = vmatprep.subr.mxu0 0.0
    %476 = vmatpush1.msra.mxu0 0.0
    %477 = vmatprep.subr.mxu0 0.0
    %478 = vmatpush1.msra.mxu0 0.0
    %479 = vmatprep.subr.mxu0 0.0
    %480 = vmatpush1.msra.mxu0 0.0
    %481 = vmatprep.subr.mxu0 0.0
    %482 = vmatpush1.msra.mxu0 0.0
    %483 = vmatprep.subr.mxu0 0.0
    %484 = vmatpush1.msra.mxu0 %v391
    %485 = vmatprep.subr.mxu0 0.0
    %486 = vmatpush1.msra.mxu0 %v390
    %487 = vmatprep.subr.mxu0 0.0
    %488 = vmatpush1.msra.mxu0 %v389
    %489 = vmatprep.subr.mxu0 0.0
    %490 = vmatpush1.msra.mxu0 %v388
    %491 = vmatprep.subr.mxu0 0.0
    %492 = vmatpush1.msra.mxu0 %v387
    %493 = vmatprep.subr.mxu0 0.0
    %494 = vmatpush1.msra.mxu0 %v386
    %495 = vmatprep.subr.mxu0 0.0
    %496 = vmatpush1.msra.mxu0 %v385
    %497 = vmatprep.subr.mxu0 0.0
    %498 = vmatpush1.msra.mxu0 %v384
    %499 = vmatprep.subr.mxu0 0.0
    %500 = vmatpush2.msra.mxu0 0.0
    %501 = vmatprep.subr.mxu0 0.0
    %502 = vmatpush2.msra.mxu0 0.0
    %503 = vmatprep.subr.mxu0 0.0
    %504 = vmatpush2.msra.mxu0 0.0
    %505 = vmatprep.subr.mxu0 0.0
    %506 = vmatpush2.msra.mxu0 0.0
    %507 = vmatprep.subr.mxu0 0.0
    %508 = vmatpush2.msra.mxu0 0.0
    %509 = vmatprep.subr.mxu0 0.0
    %510 = vmatpush2.msra.mxu0 0.0
    %511 = vmatprep.subr.mxu0 0.0
    %512 = vmatpush2.msra.mxu0 0.0
    %513 = vmatprep.subr.mxu0 0.0
    %514 = vmatpush2.msra.mxu0 0.0
    %515 = vmatprep.subr.mxu0 0.0
    %516 = vmatpush2.msra.mxu0 0.0
    %517 = vmatprep.subr.mxu0 0.0
    %518 = vmatpush2.msra.mxu0 0.0
    %519 = vmatprep.subr.mxu0 0.0
    %520 = vmatpush2.msra.mxu0 0.0
    %521 = vmatprep.subr.mxu0 0.0
    %522 = vmatpush2.msra.mxu0 0.0
    %523 = vmatprep.subr.mxu0 0.0
    %524 = vmatpush2.msra.mxu0 0.0
    %525 = vmatprep.subr.mxu0 0.0
    %526 = vmatpush2.msra.mxu0 0.0
    %527 = vmatprep.subr.mxu0 0.0
    %528 = vmatpush2.msra.mxu0 0.0
    %529 = vmatprep.subr.mxu0 0.0
    %530 = vmatpush2.msra.mxu0 0.0
    %531 = vmatprep.mubr.f32.mxu0 0.0
    %532 = vmatmul.mubr.f32.gmra.mxu0 %v444
    %v533 = vpop.f32.mrf.mxu0
    %v534 = vadd.f32 %v413, %v533
    %v535 = vpop.f32.mrf.mxu0
    %536 = vmatprep.mubr.f32.mxu0 0.0
    %537 = vmatmul.mubr.f32.gmra.mxu0 %v447
    %v538 = vpop.f32.mrf.mxu0
    %v539 = vpop.f32.mrf.mxu0
    %540 = vmatprep.mubr.f32.mxu0 0.0
    %541 = vmatmul.mubr.f32.gmra.mxu0 %v450
    %v542 = vpop.f32.mrf.mxu0
    %v543 = vpop.f32.mrf.mxu0
    %544 = vmatprep.mubr.f32.mxu0 0.0
    %545 = vmatmul.mubr.f32.gmra.mxu0 %v453
    %v546 = vpop.f32.mrf.mxu0
    %v547 = vpop.f32.mrf.mxu0
    %548 = vmatprep.mubr.f32.mxu0 0.0
    %549 = vmatmul.mubr.f32.gmra.mxu0 %v456
    %v550 = vpop.f32.mrf.mxu0
    %v551 = vpop.f32.mrf.mxu0
    %552 = vmatprep.mubr.f32.mxu0 0.0
    %553 = vmatmul.mubr.f32.gmra.mxu0 %v459
    %v554 = vpop.f32.mrf.mxu0
    %v555 = vpop.f32.mrf.mxu0
    %556 = vmatprep.mubr.f32.mxu0 0.0
    %557 = vmatmul.mubr.f32.gmra.mxu0 %v462
    %v558 = vpop.f32.mrf.mxu0
    %v559 = vpop.f32.mrf.mxu0
    %560 = vmatprep.mubr.f32.mxu0 0.0
    %561 = vmatmul.mubr.f32.gmra.mxu0 %v465
    %v562 = vpop.f32.mrf.mxu0
    %v563 = vpop.f32.mrf.mxu0
    %564 = vdwg.mxu0
    %v566 = vrot.slane %v534, 1
    %v568 = vmin.f32 %v534, %v566
    %569 = vst [vmem:[#allocation2] sm:$0x1] %v568
    // Predicated region
    $region18: #{tpu_custom_call.1} parent=1 // pred_check
      _
    $region19: #{tpu_custom_call.1} parent=1 // pred_check_branch
      %571 = sbr.rel (0) target = $region21
    $region20: #{tpu_custom_call.1} parent=1 // pred_region
      %s573 = ssub.s32 16, 16
      %574 = vsyncadd [#allocation3], %s573
      %s576 = sshll.u32 [#allocation2], 4
      %s577 = int_to_ptr.vmem [resolvable:$true] %s576
      %579 = dma.vmem_to_hbm [thread:$0]  %s577, 16, %s4, [#allocation3]
    $region21: #{tpu_custom_call.1} parent=1 // pred_fallthru
      _
    // Predicated region
    $region22: #{tpu_custom_call.1} parent=1 // pred_check
      _
    $region23: #{tpu_custom_call.1} parent=1 // pred_check_branch
      %581 = sbr.rel (0) target = $region25
    $region24: #{tpu_custom_call.1} parent=1 // pred_region
      %582 = dma.done [#allocation3], 16
    $region25: #{tpu_custom_call.1} parent=1 // pred_fallthru
      _
    %583 = vsyncpa [#allocation3], 1

</llo_original>
